<compile_context>
chip_gen: v7x
topology: tpu7x:2x2x1
jax: 0.10.0
libtpu: 0.0.40
codegen_flags: <defaults>
</compile_context>

<pallas_src>
import functools
import math

import jax
import jax.numpy as jnp
from jax.experimental import pallas as pl
from jax.experimental.pallas import tpu as pltpu

_NEG_LOG_1E4 = -math.log(1e-4)  # -log(clamp(one_hot=0, 1e-4, 1.0))


def _sce_kernel(pred_ref, labels_ref, out_ref, acc_ref, *,
                n_valid, tile_n, tiles_per_core, alpha, beta):
    """One lane-dense tile: pred_ref (C, T), labels_ref (1, T) int8 -> accumulate (1, T) row."""
    core = pl.program_id(0)
    step = pl.program_id(1)

    @pl.when(step == 0)
    def _init():
        acc_ref[...] = jnp.zeros_like(acc_ref)

    pred = pred_ref[...].astype(jnp.float32)        # (C, T): classes on sublanes, samples on lanes
    labels = labels_ref[...].astype(jnp.int32)      # (1, T)
    C, T = pred.shape

    # Mask padded columns (partial last tile / padding to cores * tiles_per_core * tile_n).
    flat_tile = core * tiles_per_core + step
    col = jax.lax.broadcasted_iota(jnp.int32, (1, T), 1) + flat_tile * tile_n
    valid = col < n_valid                            # (1, T) bool

    # One-hot mask along the small class/sublane axis.
    class_ids = jax.lax.broadcasted_iota(jnp.int32, (C, T), 0)
    is_label = class_ids == labels                   # (C, T) bool

    # ---- shared softmax pieces: single (C, T) exp per tile ------------------
    m = jnp.max(pred, axis=0, keepdims=True)         # (1, T)  sublane reduce
    z = pred - m                                     # (C, T)
    e = jnp.exp(z)                                   # (C, T)  only full-tile transcendental
    sum_e = jnp.sum(e, axis=0, keepdims=True)        # (1, T)  sublane reduce
    z_lab = jnp.sum(jnp.where(is_label, z, 0.0), axis=0, keepdims=True)   # (1, T) sublane reduce

    # ---- CE:  -log_softmax at the label = log(sum_e) - z[label] -------------
    ce_row = jnp.log(sum_e) - z_lab                  # (1, T)

    # ---- RCE: -sum_c p_c * log(clamp(onehot_c, 1e-4, 1))
    #         = -log(1e-4) * (1 - p[label]),  p[label] = exp(-ce)
    # (drops the 1e-7 lower clamp on softmax probs; deviation is bounded by ~1e-6 per sample)
    p_lab = jnp.exp(-ce_row)                         # (1, T) per-row EUP op
    rce_row = jnp.float32(_NEG_LOG_1E4) * (1.0 - p_lab)

    row = jnp.float32(alpha) * ce_row + jnp.float32(beta) * rce_row
    acc_ref[...] += jnp.where(valid, row, 0.0)       # elementwise accumulate, no per-step XLU chain

    @pl.when(step == pl.num_programs(1) - 1)
    def _finalize():
        total = jnp.sum(acc_ref[...])                # single cross-lane reduce per core
        out_ref[...] = jnp.full(out_ref.shape, total, dtype=jnp.float32)


def sce_loss(pred, labels, alpha, beta, num_classes=7, *, tile_n=131072):
    """JAX/Pallas equivalent of SCELoss(alpha, beta, num_classes)(pred, labels)."""
    N, C = pred.shape
    assert C == num_classes

    lane = 128
    # Lane-dense tiling: samples on the lane axis; cap tile at the (128-rounded) batch size.
    tile_n = max(lane, min(int(tile_n), ((N + lane - 1) // lane) * lane))
    num_tiles = (N + tile_n - 1) // tile_n

    # Split the tile axis over two TensorCores (v7x megacore); serial & harmless on v5e/v6e.
    num_cores = 2 if num_tiles >= 2 else 1
    tiles_per_core = (num_tiles + num_cores - 1) // num_cores
    n_pad = num_cores * tiles_per_core * tile_n

    pred_t = jnp.pad(pred.T, ((0, 0), (0, n_pad - N)))                       # (C, n_pad)
    labels_l = jnp.pad(labels.astype(jnp.int8), (0, n_pad - N),
                       constant_values=-1).reshape(1, n_pad)                 # (1, n_pad) int8

    kernel = functools.partial(
        _sce_kernel, n_valid=N, tile_n=tile_n, tiles_per_core=tiles_per_core,
        alpha=float(alpha), beta=float(beta))

    # 2x double-buffered pred + labels blocks (sublane-padded) + (1, tile_n) accumulator + slack.
    vmem_limit = int(min(96 * 1024 * 1024, max(32 * 1024 * 1024, 176 * tile_n + 4 * 1024 * 1024)))

    cost = pl.CostEstimate(
        flops=10 * N * C,
        transcendentals=N * C + 3 * N,                     # exp per element + log/exp per row
        bytes_accessed=N * C * pred.dtype.itemsize + N + num_cores * 8 * 128 * 4,
    )

    out = pl.pallas_call(
        kernel,
        out_shape=jax.ShapeDtypeStruct((num_cores * 8, 128), jnp.float32),
        grid=(num_cores, tiles_per_core),
        in_specs=[
            pl.BlockSpec((C, tile_n), lambda c, t: (0, c * tiles_per_core + t)),   # C == full sublane extent
            pl.BlockSpec((1, tile_n), lambda c, t: (0, c * tiles_per_core + t)),   # int8 labels, lane-dense
        ],
        out_specs=pl.BlockSpec((8, 128), lambda c, t: (c, 0)),   # private partial-sum block per core
        scratch_shapes=[pltpu.VMEM((1, tile_n), jnp.float32)],   # per-core row accumulator
        compiler_params=pltpu.CompilerParams(
            dimension_semantics=("parallel", "arbitrary"),
            vmem_limit_bytes=vmem_limit,
            allow_input_fusion=[True, True],                     # fuse transpose/pad into operand DMA
        ),
        cost_estimate=cost,
    )(pred_t, labels_l)

    partials = out[0::8, 0]                                      # one scalar per core
    return jnp.sum(partials) / jnp.float32(N)


def _reference(pred, labels, alpha, beta, num_classes):
    # pure-JAX reference for a quick sanity check
    logp = jax.nn.log_softmax(pred.astype(jnp.float32), axis=1)
    one_hot = jax.nn.one_hot(labels, num_classes, dtype=jnp.float32)
    ce = -jnp.mean(jnp.sum(one_hot * logp, axis=1))
    p = jnp.clip(jnp.exp(logp), 1e-7, 1.0)
    rce = -jnp.sum(p * jnp.log(jnp.clip(one_hot, 1e-4, 1.0)), axis=1)
    return alpha * ce + beta * jnp.mean(rce)


if __name__ == "__main__":
    key = jax.random.PRNGKey(0)
    k_pred, k_lab = jax.random.split(key)

    num_classes = 7
    alpha, beta = 0.1, 1.0

    # Case 1: small batch (single tile, single core).
    N = 8
    pred = jax.random.normal(k_pred, (N, num_classes), dtype=jnp.float32)
    labels = jax.random.randint(k_lab, (N,), 0, num_classes, dtype=jnp.int32)

    loss = sce_loss(pred, labels, alpha, beta, num_classes)
    jax.block_until_ready(loss)
    ref = _reference(pred, labels, alpha, beta, num_classes)
    assert jnp.allclose(loss, ref, atol=5e-3, rtol=5e-3), (loss, ref)

    # Case 2: multi-tile grid (forces the 2-core parallel split, per-core accumulators and
    # a masked partial last tile).
    N2 = 300
    k2p, k2l = jax.random.split(jax.random.PRNGKey(1))
    pred2 = jax.random.normal(k2p, (N2, num_classes), dtype=jnp.float32)
    labels2 = jax.random.randint(k2l, (N2,), 0, num_classes, dtype=jnp.int32)

    loss2 = sce_loss(pred2, labels2, alpha, beta, num_classes, tile_n=128)
    jax.block_until_ready(loss2)
    ref2 = _reference(pred2, labels2, alpha, beta, num_classes)
    assert jnp.allclose(loss2, ref2, atol=5e-3, rtol=5e-3), (loss2, ref2)

    # Case 3: default (large) tile path, capped to the rounded batch size.
    N3 = 1000
    k3p, k3l = jax.random.split(jax.random.PRNGKey(2))
    pred3 = jax.random.normal(k3p, (N3, num_classes), dtype=jnp.float32)
    labels3 = jax.random.randint(k3l, (N3,), 0, num_classes, dtype=jnp.int32)

    loss3 = sce_loss(pred3, labels3, alpha, beta, num_classes)
    jax.block_until_ready(loss3)
    ref3 = _reference(pred3, labels3, alpha, beta, num_classes)
    assert jnp.allclose(loss3, ref3, atol=5e-3, rtol=5e-3), (loss3, ref3)

    print("KERNEL_OK")
</pallas_src>

<mosaic_0001>
module attributes {stable_mosaic.version = 11 : i64} {
  func.func @_sce_kernel(%arg0: i32, %arg1: i32, %arg2: memref<7x128xf32, #tpu.memory_space<vmem>>, %arg3: memref<1x128xi8, #tpu.memory_space<vmem>>, %arg4: memref<8x128xf32, #tpu.memory_space<vmem>>, %arg5: memref<1x128xf32, #tpu.memory_space<vmem>>) attributes {dimension_semantics = [#tpu.dimension_semantics<parallel>, #tpu.dimension_semantics<arbitrary>], iteration_bounds = array<i64: 1, 1>, scalar_prefetch = 0 : i64, scratch_operands = 1 : i64, tpu.core_type = #tpu.core_type<tc>, window_params = [{transform_indices = @transform_0, window_bounds = array<i64: 7, 128>}, {transform_indices = @transform_1, window_bounds = array<i64: 1, 128>}, {transform_indices = @transform_2, window_bounds = array<i64: 8, 128>}]} {
    %c0_i32 = arith.constant 0 : i32
    %0 = arith.cmpi eq, %arg1, %c0_i32 : i32
    %1 = arith.extui %0 : i1 to i32
    %c0_i32_0 = arith.constant 0 : i32
    %2 = arith.cmpi ne, %1, %c0_i32_0 : i32
    scf.if %2 {
      %cst_19 = arith.constant 0.000000e+00 : f32
      %50 = vector.broadcast %cst_19 : f32 to vector<1x128xf32>
      %c0_20 = arith.constant 0 : index
      %c0_21 = arith.constant 0 : index
      %51 = vector.load %arg5[%c0_20, %c0_21] : memref<1x128xf32, #tpu.memory_space<vmem>>, vector<1x128xf32>
      tpu.vector_store %arg5[%c0_20, %c0_21], %50 {strides = array<i32>} : memref<1x128xf32, #tpu.memory_space<vmem>>, vector<1x128xf32>,
    } else {
    }
    %c0 = arith.constant 0 : index
    %c0_1 = arith.constant 0 : index
    %3 = vector.load %arg2[%c0, %c0_1] : memref<7x128xf32, #tpu.memory_space<vmem>>, vector<7x128xf32>
    %c0_2 = arith.constant 0 : index
    %c0_3 = arith.constant 0 : index
    %4 = vector.load %arg3[%c0_2, %c0_3] : memref<1x128xi8, #tpu.memory_space<vmem>>, vector<1x128xi8>
    %5 = arith.extsi %4 : vector<1x128xi8> to vector<1x128xi32>
    %c1_i32 = arith.constant 1 : i32
    %6 = arith.muli %arg0, %c1_i32 : i32
    %7 = arith.addi %6, %arg1 : i32
    %8 = tpu.iota {dimensions = array<i32: 1>} : vector<1x128xi32>
    %c128_i32 = arith.constant 128 : i32
    %9 = arith.muli %7, %c128_i32 : i32
    %10 = vector.broadcast %9 : i32 to vector<1x128xi32>
    %11 = arith.addi %8, %10 : vector<1x128xi32>
    %c8_i32 = arith.constant 8 : i32
    %12 = vector.broadcast %c8_i32 : i32 to vector<1x128xi32>
    %13 = arith.cmpi slt, %11, %12 : vector<1x128xi32>
    %14 = tpu.iota {dimensions = array<i32: 0>} : vector<7x128xi32>
    %15 = vector.broadcast %5 : vector<1x128xi32> to vector<7x128xi32>
    %16 = arith.cmpi eq, %14, %15 : vector<7x128xi32>
    %cst = arith.constant dense<0xFF800000> : vector<128xf32>
    %17 = vector.multi_reduction <maximumf>, %3, %cst [0] : vector<7x128xf32> to vector<128xf32>
    %18 = vector.shape_cast %17 : vector<128xf32> to vector<1x128xf32>
    %19 = vector.broadcast %18 : vector<1x128xf32> to vector<7x128xf32>
    %20 = arith.subf %3, %19 : vector<7x128xf32>
    %21 = math.exp %20 : vector<7x128xf32>
    %cst_4 = arith.constant dense<0.000000e+00> : vector<128xf32>
    %22 = vector.multi_reduction <add>, %21, %cst_4 [0] : vector<7x128xf32> to vector<128xf32>
    %23 = vector.shape_cast %22 : vector<128xf32> to vector<1x128xf32>
    %cst_5 = arith.constant 0.000000e+00 : f32
    %24 = vector.broadcast %cst_5 : f32 to vector<7x128xf32>
    %25 = arith.select %16, %20, %24 : vector<7x128xi1>, vector<7x128xf32>
    %cst_6 = arith.constant dense<0.000000e+00> : vector<128xf32>
    %26 = vector.multi_reduction <add>, %25, %cst_6 [0] : vector<7x128xf32> to vector<128xf32>
    %27 = vector.shape_cast %26 : vector<128xf32> to vector<1x128xf32>
    %28 = math.log %23 : vector<1x128xf32>
    %29 = arith.subf %28, %27 : vector<1x128xf32>
    %cst_7 = arith.constant 0.000000e+00 : f32
    %30 = vector.broadcast %cst_7 : f32 to vector<1x128xf32>
    %31 = arith.subf %30, %29 : vector<1x128xf32>
    %32 = math.exp %31 : vector<1x128xf32>
    %cst_8 = arith.constant 1.000000e+00 : f32
    %33 = vector.broadcast %cst_8 : f32 to vector<1x128xf32>
    %34 = arith.subf %33, %32 : vector<1x128xf32>
    %cst_9 = arith.constant 9.21034049 : f32
    %35 = vector.broadcast %cst_9 : f32 to vector<1x128xf32>
    %36 = arith.mulf %35, %34 : vector<1x128xf32>
    %cst_10 = arith.constant 1.000000e-01 : f32
    %37 = vector.broadcast %cst_10 : f32 to vector<1x128xf32>
    %38 = arith.mulf %37, %29 : vector<1x128xf32>
    %cst_11 = arith.constant 1.000000e+00 : f32
    %39 = vector.broadcast %cst_11 : f32 to vector<1x128xf32>
    %40 = arith.mulf %39, %36 : vector<1x128xf32>
    %41 = arith.addf %38, %40 : vector<1x128xf32>
    %c0_12 = arith.constant 0 : index
    %c0_13 = arith.constant 0 : index
    %42 = vector.load %arg5[%c0_12, %c0_13] : memref<1x128xf32, #tpu.memory_space<vmem>>, vector<1x128xf32>
    %cst_14 = arith.constant 0.000000e+00 : f32
    %43 = vector.broadcast %cst_14 : f32 to vector<1x128xf32>
    %44 = arith.select %13, %41, %43 : vector<1x128xi1>, vector<1x128xf32>
    %45 = arith.addf %42, %44 : vector<1x128xf32>
    %c0_15 = arith.constant 0 : index
    %c0_16 = arith.constant 0 : index
    %46 = vector.load %arg5[%c0_15, %c0_16] : memref<1x128xf32, #tpu.memory_space<vmem>>, vector<1x128xf32>
    tpu.vector_store %arg5[%c0_15, %c0_16], %45 {strides = array<i32>} : memref<1x128xf32, #tpu.memory_space<vmem>>, vector<1x128xf32>,
    %c0_i32_17 = arith.constant 0 : i32
    %47 = arith.cmpi eq, %arg1, %c0_i32_17 : i32
    %48 = arith.extui %47 : i1 to i32
    %c0_i32_18 = arith.constant 0 : i32
    %49 = arith.cmpi ne, %48, %c0_i32_18 : i32
    scf.if %49 {
      %c0_19 = arith.constant 0 : index
      %c0_20 = arith.constant 0 : index
      %50 = vector.load %arg5[%c0_19, %c0_20] : memref<1x128xf32, #tpu.memory_space<vmem>>, vector<1x128xf32>
      %51 = vector.shape_cast %50 : vector<1x128xf32> to vector<1x1x128xf32>
      %cst_21 = arith.constant dense<0.000000e+00> : vector<1xf32>
      %52 = vector.multi_reduction <add>, %51, %cst_21 [1, 2] : vector<1x1x128xf32> to vector<1xf32>
      %53 = vector.shape_cast %52 : vector<1xf32> to vector<1x1x1xf32>
      %54 = vector.extract %53[0, 0, 0] : f32 from vector<1x1x1xf32>
      %55 = vector.broadcast %54 : f32 to vector<8x128xf32>
      %c0_22 = arith.constant 0 : index
      %c0_23 = arith.constant 0 : index
      %56 = vector.load %arg4[%c0_22, %c0_23] : memref<8x128xf32, #tpu.memory_space<vmem>>, vector<8x128xf32>
      tpu.vector_store %arg4[%c0_22, %c0_23], %55 {strides = array<i32>} : memref<8x128xf32, #tpu.memory_space<vmem>>, vector<8x128xf32>,
    } else {
    }
    return
  }
  func.func @transform_0(%arg0: i32, %arg1: i32) -> (i32, i32) {
    %c1_i32 = arith.constant 1 : i32
    %0 = arith.muli %arg0, %c1_i32 : i32
    %1 = arith.addi %0, %arg1 : i32
    %c0_i32 = arith.constant 0 : i32
    %c0_i32_0 = arith.constant 0 : i32
    return %c0_i32, %1 : i32, i32
  }
  func.func @transform_1(%arg0: i32, %arg1: i32) -> (i32, i32) {
    %c1_i32 = arith.constant 1 : i32
    %0 = arith.muli %arg0, %c1_i32 : i32
    %1 = arith.addi %0, %arg1 : i32
    %c0_i32 = arith.constant 0 : i32
    %c0_i32_0 = arith.constant 0 : i32
    return %c0_i32, %1 : i32, i32
  }
  func.func @transform_2(%arg0: i32, %arg1: i32) -> (i32, i32) {
    %c0_i32 = arith.constant 0 : i32
    %c0_i32_0 = arith.constant 0 : i32
    return %arg0, %c0_i32 : i32, i32
  }
}

</mosaic_0001>

<llo_original>
// kernel: tpu_custom_call.1
$region0: #{tpu_custom_call.1}
  #allocation0 [shape = 'u32[]', space=smem, size = 0x4, offset = 0x4, fixed_abs, tag = 'smem constant byte address 0x4 - core index']
  #allocation1 [shape = 'u32[144,128]{1,0:T(1,128)}', space=vmem, size = 0x12000, scoped, tag = 'internal scratch']
  #allocation2 [shape = 'f32[1,128]{1,0:T(1,128)}', space=vmem, size = 0x200, scoped, tag = 'scratch operand']
  %s0 = inlined_call_operand.hbm [shape: f32[7,128], index: 0, kind: input, shape index: {}]
  %s1 = inlined_call_operand.vmem [shape: s8[1,128], index: 1, kind: input, shape index: {}]
  %s2 = inlined_call_operand.hbm [shape: f32[8,128], index: 2, kind: output, shape index: {}]
  %s3 = sld [smem:[#allocation0]]
  $region30: #{tpu_custom_call.1} parent=0
    _
  %s5 = ssub.s32 1, %s3
  %s6 = scalar_select 0, %s5, %s3
  $region1: #{tpu_custom_call.1} parent=0
    #allocation3 [shape = 'u8[4096]{0}', space=vmem, size = 0x1000, scoped, tag = 'input window, operand 0, single buffered']
    #allocation4 [shape = 's32[1]{0}', space=sflag, size = 0x4, scoped, tag = 'scoped memory for tpu_custom_call.1']
    #allocation5 [shape = 's32[1]{0}', space=sflag, size = 0x4, scoped, tag = 'scoped memory for tpu_custom_call.1']
    #allocation6 [shape = 'u8[4096]{0}', space=vmem, size = 0x1000, scoped, tag = 'output window, operand 0, single buffered']
    %7 = vsyncpa [#allocation4], 0
    %8 = vsyncpa [#allocation5], 0
    // Predicated region
    $region2: #{tpu_custom_call.1} parent=1 // pred_check
      _
    $region3: #{tpu_custom_call.1} parent=1 // pred_check_branch
      %10 = sbr.rel (0) target = $region5
    $region4: #{tpu_custom_call.1} parent=1 // pred_region
      %s11 = sadd.s32 0, 0
      %s13 = ssub.s32 128, 128
      %14 = vsyncadd [#allocation4], %s13
      %s15 = smul.addr %s11, 128
      %s16 = scalar_lea.hbm %s0, %s15
      %s18 = sshll.u32 [#allocation3], 4
      %s19 = int_to_ptr.vmem [resolvable:$true] %s18
      %21 = dma.hbm_to_vmem [thread:$0]  %s16, 128, %s19, [#allocation4]
    $region5: #{tpu_custom_call.1} parent=1 // pred_fallthru
      _
    // Predicated region
    $region6: #{tpu_custom_call.1} parent=1 // pred_check
      _
    $region7: #{tpu_custom_call.1} parent=1 // pred_check_branch
      %23 = sbr.rel (0) target = $region9
    $region8: #{tpu_custom_call.1} parent=1 // pred_region
      %s24 = sadd.s32 0, 0
      %p25 = scmp.lt.s32.totalorder %s24, 0
      %s26 = scalar_select %p25, %s24, 0
      %s27 = scalar_lea.vmem %s1, %s26
      %s28 = sadd.s32 0, 0
    $region9: #{tpu_custom_call.1} parent=1 // pred_fallthru
      _
    // Predicated region
    $region10: #{tpu_custom_call.1} parent=1 // pred_check
      _
    $region11: #{tpu_custom_call.1} parent=1 // pred_check_branch
      %30 = sbr.rel (0) target = $region13
    $region12: #{tpu_custom_call.1} parent=1 // pred_region
      %31 = dma.done [#allocation4], 128
    $region13: #{tpu_custom_call.1} parent=1 // pred_fallthru
      _
    %s32 = sadd.s32 0, 0
    %p33 = scmp.lt.s32.totalorder %s32, 0
    %s34 = scalar_select %p33, %s32, 0
    %s35 = scalar_lea.vmem %s1, %s34
    %s36 = sadd.s32 0, 0
    %s37 = sadd.s32 0, 0
    %p38 = scmp.lt.s32.totalorder %s37, 0
    %s39 = scalar_select %p38, %s37, 0
    %s40 = scalar_lea.vmem %s1, %s39
    %s41 = sadd.s32 0, 0
    %p42 = scmp.eq.s32.totalorder 0, 0
    // Predicated region
    $region14: #{tpu_custom_call.1} parent=1 // pred_check
      %p43 = pneg %p42
    $region15: #{tpu_custom_call.1} parent=1 // pred_check_branch
      %45 = sbr.rel (%p43) target = $region17
    $region16: #{tpu_custom_call.1} parent=1 // pred_region
      %46 = vst [vmem:[#allocation2] sm:$0x1] 0.0
    $region17: #{tpu_custom_call.1} parent=1 // pred_fallthru
      _
    %v47 = vld [vmem:[#allocation3] sm:$0x7f]
    %v48 = vld [vmem:[%s40] sm:$0x1]
    %v49 = vunpack.c.0.s8 %v48
    %s50 = sadd.s32 0, 0
    %v51 = vlaneseq
    %v52 = vand.u32 %v51, 127
    %s53 = smul.u32 %s50, 128
    %v54 = vstv %s53
    %v55 = vadd.s32 %v52, %v54
    %vm56 = vcmp.lt.s32.totalorder %v55, 8
    %v57 = vlaneseq
    %v58 = vshrl.u32 %v57, 7
    %v59 = vlaneseq
    %v60 = vshrl.u32 %v59, 7
    %v61 = vsub.s32 0, %v60
    %v62 = vrot.slane %v49, %v61
    %vm63 = vcmp.eq.s32.totalorder %v58, %v62
    %vm64 = vcmask 1046528
    %v65 = vsel %vm64, %v47, -inf
    %v66 = vrot.slane %v65, 4
    %v67 = vmax.f32 %v65, %v66
    %v68 = vrot.slane %v67, 2
    %v69 = vmax.f32 %v67, %v68
    %v70 = vrot.slane %v69, 1
    %v71 = vmax.f32 %v69, %v70
    %v72 = vsub.f32 %v47, %v71
    %v73 = vmul.f32 %v72, 1.442695
    %v74 = vpow.pop %v73
    %v75 = vsel %vm64, %v74, 0.0
    %v76 = vrot.slane %v75, 4
    %v77 = vadd.f32 %v75, %v76
    %v78 = vrot.slane %v77, 2
    %v79 = vadd.f32 %v77, %v78
    %v80 = vrot.slane %v79, 1
    %v81 = vadd.f32 %v79, %v80
    %v82 = vsel %vm63, %v72, 0.0
    %v83 = vsel %vm64, %v82, 0.0
    %v84 = vrot.slane %v83, 4
    %v85 = vadd.f32 %v83, %v84
    %v86 = vrot.slane %v85, 2
    %v87 = vadd.f32 %v85, %v86
    %v88 = vrot.slane %v87, 1
    %v89 = vadd.f32 %v87, %v88
    %v90 = vlog2.pop %v81
    %v91 = vmul.f32 %v90, 0.6931472
    %v92 = vsub.f32 %v91, %v89
    %v93 = vsub.f32 0.0, %v92
    %v94 = vmul.f32 %v93, 1.442695
    %v95 = vpow.pop %v94
    %v96 = vsub.f32 1.0, %v95
    %v97 = vmul.f32 %v96, 9.2103405
    %v98 = vmul.f32 %v92, 0.1
    %v99 = vadd.f32 %v98, %v97
    %v100 = vld [vmem:[#allocation2] sm:$0x1]
    %v101 = vsel %vm56, %v99, 0.0
    %v102 = vadd.f32 %v100, %v101
    %103 = vst [vmem:[#allocation2] sm:$0x1] %v102
    // Predicated region
    $region18: #{tpu_custom_call.1} parent=1 // pred_check
      %p104 = pneg %p42
    $region19: #{tpu_custom_call.1} parent=1 // pred_check_branch
      %106 = sbr.rel (%p104) target = $region21
    $region20: #{tpu_custom_call.1} parent=1 // pred_region
      %v107 = vld [vmem:[#allocation2] sm:$0x1]
      %vm108 = vcmask 1040384
      %v109 = vsel %vm108, %v107, 0.0
      %110 = vadd.xlane.f32.xlu0 %v109
      %v111 = vpop.xlane.xlu0 %110
      %v112 = vrot.slane %v111, 4
      %v113 = vadd.f32 %v111, %v112
      %v114 = vrot.slane %v113, 2
      %v115 = vadd.f32 %v113, %v114
      %v116 = vrot.slane %v115, 1
      %v117 = vadd.f32 %v115, %v116
      %s118 = vtos %v117
      %v119 = vstv %s118
      %120 = vst [vmem:[#allocation6] sm:$0xff] %v119
    $region21: #{tpu_custom_call.1} parent=1 // pred_fallthru
      _
    // Predicated region
    $region22: #{tpu_custom_call.1} parent=1 // pred_check
      _
    $region23: #{tpu_custom_call.1} parent=1 // pred_check_branch
      %122 = sbr.rel (0) target = $region25
    $region24: #{tpu_custom_call.1} parent=1 // pred_region
      %s124 = ssub.s32 128, 128
      %125 = vsyncadd [#allocation5], %s124
      %s127 = sshll.u32 [#allocation6], 4
      %s128 = int_to_ptr.vmem [resolvable:$true] %s127
      %130 = dma.vmem_to_hbm [thread:$0]  %s128, 128, %s2, [#allocation5]
    $region25: #{tpu_custom_call.1} parent=1 // pred_fallthru
      _
    // Predicated region
    $region26: #{tpu_custom_call.1} parent=1 // pred_check
      _
    $region27: #{tpu_custom_call.1} parent=1 // pred_check_branch
      %132 = sbr.rel (0) target = $region29
    $region28: #{tpu_custom_call.1} parent=1 // pred_region
      %133 = dma.done [#allocation5], 128
    $region29: #{tpu_custom_call.1} parent=1 // pred_fallthru
      _
    %134 = vsyncpa [#allocation4], 1
    %135 = vsyncpa [#allocation5], 1

</llo_original>
